<compile_context>
chip_gen: v6e
topology: v6e:2x2x1
jax: 0.10.0
libtpu: 0.0.40
codegen_flags: <defaults>
</compile_context>

<pallas_src>
import jax
import jax.numpy as jnp
from jax.experimental import pallas as pl
from jax.experimental.pallas import tpu as pltpu


def _round_up(v, m):
    return (v + m - 1) // m * m


def _tpu_vmem_and_cores():
    """Returns (VMEM bytes per TensorCore, likely TensorCores per chip) with safe fallbacks."""
    cap = 64 * 1024 * 1024  # conservative default: v7x has the least VMEM
    try:
        cap = int(pltpu.get_tpu_info().vmem_capacity_bytes)
    except Exception:
        pass
    # v7x (64 MiB VMEM / TC) is the only generation with 2 TensorCores per chip.
    cores = 2 if cap <= 64 * 1024 * 1024 else 1
    return cap, cores


def _sae_kernel_resident(x_ref, w_enc_ref, b_enc_ref, w_dec_ref, b_dec_ref, out_ref):
    # Full W_enc / W_dec resident in VMEM: single fused encode -> relu -> decode.
    pre = jnp.dot(x_ref[...], w_enc_ref[...], preferred_element_type=jnp.float32)
    feats = jnp.maximum(pre + b_enc_ref[...], 0.0)
    dec = jnp.dot(feats.astype(w_dec_ref.dtype), w_dec_ref[...],
                  preferred_element_type=jnp.float32)
    out_ref[...] = (dec + b_dec_ref[...]).astype(out_ref.dtype)


def _sae_kernel_ktiled(x_ref, w_enc_ref, b_enc_ref, w_dec_ref, b_dec_ref, out_ref, acc_ref):
    # d_sae tiled on the last (reduction) grid axis; f32 accumulator resident in VMEM.
    k = pl.program_id(1)
    pre = jnp.dot(x_ref[...], w_enc_ref[...], preferred_element_type=jnp.float32)
    feats = jnp.maximum(pre + b_enc_ref[...], 0.0)
    dec = jnp.dot(feats.astype(w_dec_ref.dtype), w_dec_ref[...],
                  preferred_element_type=jnp.float32)

    @pl.when(k == 0)
    def _():
        acc_ref[...] = dec            # first contribution: plain store (no zero-init + RMW)

    @pl.when(k > 0)
    def _():
        acc_ref[...] += dec

    @pl.when(k == pl.num_programs(1) - 1)
    def _():
        out_ref[...] = (acc_ref[...] + b_dec_ref[...]).astype(out_ref.dtype)


def sae_forward(x, w_enc, b_enc, w_dec, b_dec, *, tb=None, t_sae=None):
    B, d_in = x.shape
    d_in_w, d_sae = w_enc.shape
    assert d_in_w == d_in and w_dec.shape == (d_sae, d_in)

    out_dtype = x.dtype
    w_dtype = w_enc.dtype
    isw = jnp.dtype(w_dtype).itemsize
    isx = isw                                      # x is fed to the MXU in the weight dtype
    iso = jnp.dtype(out_dtype).itemsize

    b_enc = b_enc.reshape(1, d_sae).astype(jnp.float32)
    b_dec = b_dec.reshape(1, d_in).astype(jnp.float32)

    # Pre-encoder centering (x - b_dec) done once here: O(B*d_in) work, instead of folding
    # b_dec @ W_enc into the encoder bias (which re-reads all of W_enc every call).
    x_mm = (x.astype(jnp.float32) - b_dec).astype(w_dtype)

    vmem_cap, n_cores = _tpu_vmem_and_cores()
    budget = int(vmem_cap * 0.80)                  # headroom for Mosaic scratch / semaphores

    d_sae_al = _round_up(d_sae, 128)               # lane alignment for the feature axis

    def vmem_bytes(tb_, ts_, nk_):
        return (2 * tb_ * d_in * isx                        # x tiles (double-buffered)
                + 2 * (d_in * ts_ + ts_ * d_in) * isw       # W_enc + W_dec tiles
                + 2 * (ts_ + d_in) * 4                      # biases
                + 2 * tb_ * d_in * iso                      # out tiles
                + (tb_ * d_in * 4 if nk_ > 1 else 0)        # f32 accumulator scratch
                + 2 * tb_ * ts_ * 4                         # pre / feats temporaries
                + tb_ * d_in * 4)                           # decode temporary

    # ---- tile candidates ----
    if tb is None:
        if B <= 128:
            tb_cands = [_round_up(max(B, 1), 8)]
        else:
            b_cap = min(1024, _round_up(B, 128))
            tb_cands = sorted({t for t in (1024, 512, 256, 128) if t <= b_cap} | {b_cap},
                              reverse=True)
    else:
        tb_cands = [_round_up(tb, 8) if tb < 128 else _round_up(tb, 128)]

    if t_sae is not None:
        t_sae = _round_up(t_sae, 128)
        d_sae_al = _round_up(d_sae, t_sae)
        ts_cands = [t_sae]
    else:
        # 128-multiple divisors of the aligned feature dim, largest first: no weight
        # padding copies are needed unless d_sae itself is not 128-aligned.
        ts_cands = [m for m in range(d_sae_al, 0, -128) if d_sae_al % m == 0]

    chosen = None
    # 1) Prefer fully-resident weights: d_sae axis collapses, weights DMA'd once per call.
    if t_sae is None or ts_cands[0] == d_sae_al:
        for tb_c in tb_cands:
            if vmem_bytes(tb_c, d_sae_al, 1) <= budget:
                chosen = (tb_c, d_sae_al)
                break
    # 2) Otherwise maximize the batch tile (AI ~ tb FLOP / weight byte), then t_sae.
    if chosen is None:
        for tb_c in tb_cands:
            for ts_c in ts_cands:
                if vmem_bytes(tb_c, ts_c, 2) <= budget:
                    chosen = (tb_c, ts_c)
                    break
            if chosen is not None:
                break
    if chosen is None:
        chosen = (tb_cands[-1], ts_cands[-1])      # smallest tiles; let Mosaic try anyway
    tb, t_sae = chosen

    # Feed both TensorCores (v7x) when the batch is large enough. In the resident case
    # this is free (weights are DMA'd once regardless of the number of batch tiles).
    if n_cores >= 2 and B >= 256:
        tb = min(tb, max(128, _round_up((B + 1) // 2, 128)))

    Bp = _round_up(B, tb)
    Dp = _round_up(d_sae_al, t_sae)
    nk = Dp // t_sae

    if Bp != B:
        x_mm = jnp.pad(x_mm, ((0, Bp - B), (0, 0)))
    if Dp != d_sae:
        # Only hit when d_sae is not 128-aligned (rare for SAEs); zero padding is exact
        # because padded features are relu(0)=0 and padded W_dec rows are zero.
        # TODO(synk): mask the ragged last d_sae tile in-kernel instead of padding copies.
        w_enc = jnp.pad(w_enc, ((0, 0), (0, Dp - d_sae)))
        w_dec = jnp.pad(w_dec, ((0, Dp - d_sae), (0, 0)))
        b_enc = jnp.pad(b_enc, ((0, 0), (0, Dp - d_sae)))

    n_btiles = Bp // tb
    vmem_est = vmem_bytes(tb, t_sae, nk)
    vmem_limit = int(min(vmem_cap * 0.85, max(vmem_est * 5 // 4, 32 * 1024 * 1024)))

    weight_streams = 1 if nk == 1 else n_btiles    # weight HBM reads per call
    cost = pl.CostEstimate(
        flops=4 * Bp * d_in * Dp,                  # two matmuls, 2*M*N*K each
        transcendentals=0,
        bytes_accessed=(Bp * d_in * isx
                        + weight_streams * (w_enc.size + w_dec.size) * isw
                        + (b_enc.size + b_dec.size) * 4
                        + Bp * d_in * iso),
    )

    if nk == 1:
        grid_spec = pltpu.PrefetchScalarGridSpec(
            num_scalar_prefetch=0,
            grid=(n_btiles,),
            in_specs=[
                pl.BlockSpec((tb, d_in), lambda i: (i, 0)),    # x tile
                pl.BlockSpec((d_in, Dp), lambda i: (0, 0)),    # W_enc (resident)
                pl.BlockSpec((1, Dp),    lambda i: (0, 0)),    # b_enc
                pl.BlockSpec((Dp, d_in), lambda i: (0, 0)),    # W_dec (resident)
                pl.BlockSpec((1, d_in),  lambda i: (0, 0)),    # b_dec
            ],
            out_specs=pl.BlockSpec((tb, d_in), lambda i: (i, 0)),
            scratch_shapes=[],
        )
        kernel = _sae_kernel_resident
        dim_sem = ("parallel",)
    else:
        grid_spec = pltpu.PrefetchScalarGridSpec(
            num_scalar_prefetch=0,
            grid=(n_btiles, nk),
            in_specs=[
                pl.BlockSpec((tb, d_in),    lambda i, k: (i, 0)),   # x tile
                pl.BlockSpec((d_in, t_sae), lambda i, k: (0, k)),   # W_enc column tile
                pl.BlockSpec((1, t_sae),    lambda i, k: (0, k)),   # b_enc tile
                pl.BlockSpec((t_sae, d_in), lambda i, k: (k, 0)),   # W_dec row tile
                pl.BlockSpec((1, d_in),     lambda i, k: (0, 0)),   # b_dec
            ],
            out_specs=pl.BlockSpec((tb, d_in), lambda i, k: (i, 0)),
            scratch_shapes=[pltpu.VMEM((tb, d_in), jnp.float32)],   # f32 accumulator
        )
        kernel = _sae_kernel_ktiled
        dim_sem = ("parallel", "arbitrary")

    out_padded = pl.pallas_call(
        kernel,
        out_shape=jax.ShapeDtypeStruct((Bp, d_in), out_dtype),
        grid_spec=grid_spec,
        compiler_params=pltpu.CompilerParams(
            dimension_semantics=dim_sem,
            vmem_limit_bytes=vmem_limit,
        ),
        cost_estimate=cost,
    )(x_mm, w_enc, b_enc, w_dec, b_dec)

    return out_padded[:B] if Bp != B else out_padded


def sae_forward_ref(x, w_enc, b_enc, w_dec, b_dec):
    feats = jnp.maximum((x - b_dec) @ w_enc + b_enc, 0.0)
    return feats @ w_dec + b_dec


if __name__ == "__main__":
    # Small shapes consistent with the module: x is (batch, d_in) per the ONNX export.
    B, d_in, d_sae = 8, 128, 256

    key = jax.random.PRNGKey(0)
    kx, kwe, kbe, kwd, kbd = jax.random.split(key, 5)

    x = jax.random.normal(kx, (B, d_in), dtype=jnp.float32)
    # Deterministic synthetic SAE parameters (no checkpoint load).
    w_enc = jax.random.normal(kwe, (d_in, d_sae), dtype=jnp.float32) / jnp.sqrt(d_in)
    b_enc = jax.random.normal(kbe, (1, d_sae), dtype=jnp.float32) * 0.01
    w_dec = jax.random.normal(kwd, (d_sae, d_in), dtype=jnp.float32) / jnp.sqrt(d_sae)
    b_dec = jax.random.normal(kbd, (1, d_in), dtype=jnp.float32) * 0.01

    ref = sae_forward_ref(x, w_enc, b_enc, w_dec, b_dec)

    # f32, fully-resident-weights path (d_sae grid axis collapses to one step).
    out = jax.block_until_ready(sae_forward(x, w_enc, b_enc, w_dec, b_dec))
    assert out.shape == (B, d_in)
    assert jnp.allclose(out, ref, atol=1e-3, rtol=1e-3), "resident path mismatch"

    # f32, k-tiled accumulator path (force t_sae < d_sae to exercise it).
    out_kt = jax.block_until_ready(sae_forward(x, w_enc, b_enc, w_dec, b_dec, t_sae=128))
    assert jnp.allclose(out_kt, ref, atol=1e-3, rtol=1e-3), "k-tiled path mismatch"

    # bf16-weight path (weights cast once at the caller), checked against a bf16 reference.
    w_enc_bf, w_dec_bf = w_enc.astype(jnp.bfloat16), w_dec.astype(jnp.bfloat16)
    out_bf = jax.block_until_ready(sae_forward(x, w_enc_bf, b_enc, w_dec_bf, b_dec))
    xb = (x - b_dec).astype(jnp.bfloat16)
    feats_bf = jnp.maximum(
        jnp.dot(xb, w_enc_bf, preferred_element_type=jnp.float32) + b_enc, 0.0)
    ref_bf = jnp.dot(feats_bf.astype(jnp.bfloat16), w_dec_bf,
                     preferred_element_type=jnp.float32) + b_dec
    assert out_bf.shape == (B, d_in)
    assert jnp.allclose(out_bf.astype(jnp.float32), ref_bf, atol=5e-2, rtol=5e-2), \
        "bf16 path mismatch"

    print("KERNEL_OK")
</pallas_src>

<mosaic_0001>
module attributes {stable_mosaic.version = 11 : i64} {
  func.func @_sae_kernel_resident(%arg0: i32, %arg1: memref<8x128xf32, #tpu.memory_space<vmem>>, %arg2: memref<128x256xf32, #tpu.memory_space<vmem>>, %arg3: memref<1x256xf32, #tpu.memory_space<vmem>>, %arg4: memref<256x128xf32, #tpu.memory_space<vmem>>, %arg5: memref<1x128xf32, #tpu.memory_space<vmem>>, %arg6: memref<8x128xf32, #tpu.memory_space<vmem>>) attributes {dimension_semantics = [#tpu.dimension_semantics<parallel>], iteration_bounds = array<i64: 1>, scalar_prefetch = 0 : i64, scratch_operands = 0 : i64, tpu.core_type = #tpu.core_type<tc>, window_params = [{transform_indices = @transform_0, window_bounds = array<i64: 8, 128>}, {pipeline_mode = #tpu.pipeline_mode<synchronous>, transform_indices = @transform_1, window_bounds = array<i64: 128, 256>}, {pipeline_mode = #tpu.pipeline_mode<synchronous>, transform_indices = @transform_2, window_bounds = array<i64: 1, 256>}, {pipeline_mode = #tpu.pipeline_mode<synchronous>, transform_indices = @transform_3, window_bounds = array<i64: 256, 128>}, {pipeline_mode = #tpu.pipeline_mode<synchronous>, transform_indices = @transform_4, window_bounds = array<i64: 1, 128>}, {transform_indices = @transform_5, window_bounds = array<i64: 8, 128>}]} {
    %c0 = arith.constant 0 : index
    %c0_0 = arith.constant 0 : index
    %0 = vector.load %arg1[%c0, %c0_0] : memref<8x128xf32, #tpu.memory_space<vmem>>, vector<8x128xf32>
    %c0_1 = arith.constant 0 : index
    %c0_2 = arith.constant 0 : index
    %1 = vector.load %arg2[%c0_1, %c0_2] : memref<128x256xf32, #tpu.memory_space<vmem>>, vector<128x256xf32>
    %cst = arith.constant dense<0.000000e+00> : vector<8x256xf32>
    %2 = tpu.matmul %0, %1, %cst {dimension_numbers = #tpu.dot_dimension_numbers<[1], [0], [0], [1], [0, 0, 1, 1], [], []>} : vector<8x128xf32>, vector<128x256xf32>, vector<8x256xf32> -> vector<8x256xf32>
    %c0_3 = arith.constant 0 : index
    %c0_4 = arith.constant 0 : index
    %3 = vector.load %arg3[%c0_3, %c0_4] : memref<1x256xf32, #tpu.memory_space<vmem>>, vector<1x256xf32>
    %4 = vector.broadcast %3 : vector<1x256xf32> to vector<8x256xf32>
    %5 = arith.addf %2, %4 : vector<8x256xf32>
    %cst_5 = arith.constant 0.000000e+00 : f32
    %6 = vector.broadcast %cst_5 : f32 to vector<8x256xf32>
    %7 = arith.maximumf %5, %6 : vector<8x256xf32>
    %c0_6 = arith.constant 0 : index
    %c0_7 = arith.constant 0 : index
    %8 = vector.load %arg4[%c0_6, %c0_7] : memref<256x128xf32, #tpu.memory_space<vmem>>, vector<256x128xf32>
    %cst_8 = arith.constant dense<0.000000e+00> : vector<8x128xf32>
    %9 = tpu.matmul %7, %8, %cst_8 {dimension_numbers = #tpu.dot_dimension_numbers<[1], [0], [0], [1], [0, 0, 1, 1], [], []>} : vector<8x256xf32>, vector<256x128xf32>, vector<8x128xf32> -> vector<8x128xf32>
    %c0_9 = arith.constant 0 : index
    %c0_10 = arith.constant 0 : index
    %10 = vector.load %arg5[%c0_9, %c0_10] : memref<1x128xf32, #tpu.memory_space<vmem>>, vector<1x128xf32>
    %11 = vector.broadcast %10 : vector<1x128xf32> to vector<8x128xf32>
    %12 = arith.addf %9, %11 : vector<8x128xf32>
    %c0_11 = arith.constant 0 : index
    %c0_12 = arith.constant 0 : index
    %13 = vector.load %arg6[%c0_11, %c0_12] : memref<8x128xf32, #tpu.memory_space<vmem>>, vector<8x128xf32>
    tpu.vector_store %arg6[%c0_11, %c0_12], %12 {strides = array<i32>} : memref<8x128xf32, #tpu.memory_space<vmem>>, vector<8x128xf32>,
    return
  }
  func.func @transform_0(%arg0: i32) -> (i32, i32) {
    %c0_i32 = arith.constant 0 : i32
    %c0_i32_0 = arith.constant 0 : i32
    return %arg0, %c0_i32 : i32, i32
  }
  func.func @transform_1(%arg0: i32) -> (i32, i32) {
    %c0_i32 = arith.constant 0 : i32
    %c0_i32_0 = arith.constant 0 : i32
    %c0_i32_1 = arith.constant 0 : i32
    return %c0_i32, %c0_i32_0 : i32, i32
  }
  func.func @transform_2(%arg0: i32) -> (i32, i32) {
    %c0_i32 = arith.constant 0 : i32
    %c0_i32_0 = arith.constant 0 : i32
    %c0_i32_1 = arith.constant 0 : i32
    return %c0_i32, %c0_i32_0 : i32, i32
  }
  func.func @transform_3(%arg0: i32) -> (i32, i32) {
    %c0_i32 = arith.constant 0 : i32
    %c0_i32_0 = arith.constant 0 : i32
    %c0_i32_1 = arith.constant 0 : i32
    return %c0_i32, %c0_i32_0 : i32, i32
  }
  func.func @transform_4(%arg0: i32) -> (i32, i32) {
    %c0_i32 = arith.constant 0 : i32
    %c0_i32_0 = arith.constant 0 : i32
    %c0_i32_1 = arith.constant 0 : i32
    return %c0_i32, %c0_i32_0 : i32, i32
  }
  func.func @transform_5(%arg0: i32) -> (i32, i32) {
    %c0_i32 = arith.constant 0 : i32
    %c0_i32_0 = arith.constant 0 : i32
    return %arg0, %c0_i32 : i32, i32
  }
}

</mosaic_0001>

<llo_original>
// kernel: tpu_custom_call.1
$region0: #{tpu_custom_call.1}
  #allocation0 [shape = 'u32[]', space=smem, size = 0x4, offset = 0x4, fixed_abs, tag = 'smem constant byte address 0x4 - core index']
  #allocation1 [shape = 'u32[144,128]{1,0:T(1,128)}', space=vmem, size = 0x12000, scoped, tag = 'internal scratch']
  %s0 = inlined_call_operand.hbm [shape: f32[8,128], index: 0, kind: input, shape index: {}]
  %s1 = inlined_call_operand.hbm [shape: f32[128,256], index: 1, kind: input, shape index: {}]
  %s2 = inlined_call_operand.vmem [shape: f32[1,256], index: 2, kind: input, shape index: {}]
  %s3 = inlined_call_operand.hbm [shape: f32[256,128], index: 3, kind: input, shape index: {}]
  %s4 = inlined_call_operand.vmem [shape: f32[1,128], index: 4, kind: input, shape index: {}]
  %s5 = inlined_call_operand.hbm [shape: f32[8,128], index: 5, kind: output, shape index: {}]
  %s6 = sld [smem:[#allocation0]]
  $region42: #{tpu_custom_call.1} parent=0
    _
  %s8 = ssub.s32 1, %s6
  %s9 = scalar_select 0, %s8, %s6
  $region1: #{tpu_custom_call.1} parent=0
    #allocation2 [shape = 'u8[4096]{0}', space=vmem, size = 0x1000, scoped, tag = 'input window, operand 0, single buffered']
    #allocation3 [shape = 's32[1]{0}', space=sflag, size = 0x4, scoped, tag = 'scoped memory for tpu_custom_call.1']
    #allocation4 [shape = 's32[1]{0}', space=sflag, size = 0x4, scoped, tag = 'scoped memory for tpu_custom_call.1']
    #allocation5 [shape = 'u8[131072]{0}', space=vmem, size = 0x20000, scoped, tag = 'input window, operand 1, single buffered']
    #allocation6 [shape = 's32[1]{0}', space=sflag, size = 0x4, scoped, tag = 'scoped memory for tpu_custom_call.1']
    #allocation7 [shape = 'u8[131072]{0}', space=vmem, size = 0x20000, scoped, tag = 'input window, operand 3, single buffered']
    #allocation8 [shape = 'u8[4096]{0}', space=vmem, size = 0x1000, scoped, tag = 'output window, operand 0, single buffered']
    %10 = vsyncpa [#allocation3], 0
    %11 = vsyncpa [#allocation6], 0
    %12 = vsyncpa [#allocation4], 0
    // Predicated region
    $region2: #{tpu_custom_call.1} parent=1 // pred_check
      _
    $region3: #{tpu_custom_call.1} parent=1 // pred_check_branch
      %14 = sbr.rel (0) target = $region5
    $region4: #{tpu_custom_call.1} parent=1 // pred_region
      %s16 = ssub.s32 128, 128
      %17 = vsyncadd [#allocation3], %s16
      %s19 = sshll.u32 [#allocation2], 4
      %s20 = int_to_ptr.vmem [resolvable:$true] %s19
      %22 = dma.hbm_to_vmem [thread:$0]  %s0, 128, %s20, [#allocation3]
    $region5: #{tpu_custom_call.1} parent=1 // pred_fallthru
      _
    // Predicated region
    $region6: #{tpu_custom_call.1} parent=1 // pred_check
      _
    $region7: #{tpu_custom_call.1} parent=1 // pred_check_branch
      %24 = sbr.rel (0) target = $region9
    $region8: #{tpu_custom_call.1} parent=1 // pred_region
      %s26 = ssub.s32 4096, 4096
      %27 = vsyncadd [#allocation6], %s26
      %s28 = sshll.u32 [#allocation5], 4
      %s29 = int_to_ptr.vmem [resolvable:$true] %s28
      %34 = dma.hbm_to_vmem [thread:$0]  %s1, 4096, %s29, [#allocation6], 256, 256, 16
    $region9: #{tpu_custom_call.1} parent=1 // pred_fallthru
      _
    // Predicated region
    $region10: #{tpu_custom_call.1} parent=1 // pred_check
      _
    $region11: #{tpu_custom_call.1} parent=1 // pred_check_branch
      %36 = sbr.rel (0) target = $region13
    $region12: #{tpu_custom_call.1} parent=1 // pred_region
      _
    $region13: #{tpu_custom_call.1} parent=1 // pred_fallthru
      _
    // Predicated region
    $region14: #{tpu_custom_call.1} parent=1 // pred_check
      _
    $region15: #{tpu_custom_call.1} parent=1 // pred_check_branch
      %38 = sbr.rel (0) target = $region17
    $region16: #{tpu_custom_call.1} parent=1 // pred_region
      %s40 = ssub.s32 4096, 4096
      %41 = vsyncadd [#allocation6], %s40
      %s42 = sshll.u32 [#allocation7], 4
      %s43 = int_to_ptr.vmem [resolvable:$true] %s42
      %48 = dma.hbm_to_vmem [thread:$0]  %s3, 4096, %s43, [#allocation6], 128, 128, 8
    $region17: #{tpu_custom_call.1} parent=1 // pred_fallthru
      _
    // Predicated region
    $region18: #{tpu_custom_call.1} parent=1 // pred_check
      _
    $region19: #{tpu_custom_call.1} parent=1 // pred_check_branch
      %50 = sbr.rel (0) target = $region21
    $region20: #{tpu_custom_call.1} parent=1 // pred_region
      _
    $region21: #{tpu_custom_call.1} parent=1 // pred_fallthru
      _
    // Predicated region
    $region22: #{tpu_custom_call.1} parent=1 // pred_check
      _
    $region23: #{tpu_custom_call.1} parent=1 // pred_check_branch
      %52 = sbr.rel (0) target = $region25
    $region24: #{tpu_custom_call.1} parent=1 // pred_region
      %53 = dma.done [#allocation3], 128
    $region25: #{tpu_custom_call.1} parent=1 // pred_fallthru
      _
    // Predicated region
    $region26: #{tpu_custom_call.1} parent=1 // pred_check
      _
    $region27: #{tpu_custom_call.1} parent=1 // pred_check_branch
      %55 = sbr.rel (0) target = $region29
    $region28: #{tpu_custom_call.1} parent=1 // pred_region
      %56 = dma.done [#allocation6], 4096
    $region29: #{tpu_custom_call.1} parent=1 // pred_fallthru
      _
    // Predicated region
    $region30: #{tpu_custom_call.1} parent=1 // pred_check
      _
    $region31: #{tpu_custom_call.1} parent=1 // pred_check_branch
      %58 = sbr.rel (0) target = $region33
    $region32: #{tpu_custom_call.1} parent=1 // pred_region
      %59 = dma.done [#allocation6], 4096
    $region33: #{tpu_custom_call.1} parent=1 // pred_fallthru
      _
    %v60 = vld [vmem:[#allocation2] sm:$0xff]
    %v61 = vld [vmem:[#allocation5] sm:$0xff]
    %v62 = vld [vmem:[#allocation5 + $0x8] sm:$0xff]
    %v63 = vld [vmem:[#allocation5 + $0x10] sm:$0xff]
    %v64 = vld [vmem:[#allocation5 + $0x18] sm:$0xff]
    %v65 = vld [vmem:[#allocation5 + $0x20] sm:$0xff]
    %v66 = vld [vmem:[#allocation5 + $0x28] sm:$0xff]
    %v67 = vld [vmem:[#allocation5 + $0x30] sm:$0xff]
    %v68 = vld [vmem:[#allocation5 + $0x38] sm:$0xff]
    %v69 = vld [vmem:[#allocation5 + $0x40] sm:$0xff]
    %v70 = vld [vmem:[#allocation5 + $0x48] sm:$0xff]
    %v71 = vld [vmem:[#allocation5 + $0x50] sm:$0xff]
    %v72 = vld [vmem:[#allocation5 + $0x58] sm:$0xff]
    %v73 = vld [vmem:[#allocation5 + $0x60] sm:$0xff]
    %v74 = vld [vmem:[#allocation5 + $0x68] sm:$0xff]
    %v75 = vld [vmem:[#allocation5 + $0x70] sm:$0xff]
    %v76 = vld [vmem:[#allocation5 + $0x78] sm:$0xff]
    %v77 = vld [vmem:[#allocation5 + $0x80] sm:$0xff]
    %v78 = vld [vmem:[#allocation5 + $0x88] sm:$0xff]
    %v79 = vld [vmem:[#allocation5 + $0x90] sm:$0xff]
    %v80 = vld [vmem:[#allocation5 + $0x98] sm:$0xff]
    %v81 = vld [vmem:[#allocation5 + $0xa0] sm:$0xff]
    %v82 = vld [vmem:[#allocation5 + $0xa8] sm:$0xff]
    %v83 = vld [vmem:[#allocation5 + $0xb0] sm:$0xff]
    %v84 = vld [vmem:[#allocation5 + $0xb8] sm:$0xff]
    %v85 = vld [vmem:[#allocation5 + $0xc0] sm:$0xff]
    %v86 = vld [vmem:[#allocation5 + $0xc8] sm:$0xff]
    %v87 = vld [vmem:[#allocation5 + $0xd0] sm:$0xff]
    %v88 = vld [vmem:[#allocation5 + $0xd8] sm:$0xff]
    %v89 = vld [vmem:[#allocation5 + $0xe0] sm:$0xff]
    %v90 = vld [vmem:[#allocation5 + $0xe8] sm:$0xff]
    %v91 = vld [vmem:[#allocation5 + $0xf0] sm:$0xff]
    %v92 = vld [vmem:[#allocation5 + $0xf8] sm:$0xff]
    %v93 = vld [vmem:[%s2] sm:$0x3]
    %v95 = vlaneseq
    %v96 = vshrl.u32 %v95, 7
    %v97 = vsub.s32 0, %v96
    %v98 = vrot.slane %v93, %v97
    %v99 = vlaneseq
    %v100 = vshrl.u32 %v99, 7
    %v101 = vsub.s32 1, %v100
    %v102 = vrot.slane %v93, %v101
    %105 = vmatprep.subr.mxu0 %v92
    %106 = vmatpush1.msra.mxu0 %v91
    %107 = vmatprep.subr.mxu0 %v90
    %108 = vmatpush1.msra.mxu0 %v89
    %109 = vmatprep.subr.mxu0 %v88
    %110 = vmatpush1.msra.mxu0 %v87
    %111 = vmatprep.subr.mxu0 %v86
    %112 = vmatpush1.msra.mxu0 %v85
    %113 = vmatprep.subr.mxu0 %v84
    %114 = vmatpush1.msra.mxu0 %v83
    %115 = vmatprep.subr.mxu0 %v82
    %116 = vmatpush1.msra.mxu0 %v81
    %117 = vmatprep.subr.mxu0 %v80
    %118 = vmatpush1.msra.mxu0 %v79
    %119 = vmatprep.subr.mxu0 %v78
    %120 = vmatpush1.msra.mxu0 %v77
    %121 = vmatprep.subr.mxu0 %v76
    %122 = vmatpush1.msra.mxu0 %v75
    %123 = vmatprep.subr.mxu0 %v74
    %124 = vmatpush1.msra.mxu0 %v73
    %125 = vmatprep.subr.mxu0 %v72
    %126 = vmatpush1.msra.mxu0 %v71
    %127 = vmatprep.subr.mxu0 %v70
    %128 = vmatpush1.msra.mxu0 %v69
    %129 = vmatprep.subr.mxu0 %v68
    %130 = vmatpush1.msra.mxu0 %v67
    %131 = vmatprep.subr.mxu0 %v66
    %132 = vmatpush1.msra.mxu0 %v65
    %133 = vmatprep.subr.mxu0 %v64
    %134 = vmatpush1.msra.mxu0 %v63
    %135 = vmatprep.subr.mxu0 %v62
    %136 = vmatpush1.msra.mxu0 %v61
    %137 = vmatprep.subr.mxu0 0.0
    %138 = vmatpush2.msra.mxu0 0.0
    %139 = vmatprep.subr.mxu0 0.0
    %140 = vmatpush2.msra.mxu0 0.0
    %141 = vmatprep.subr.mxu0 0.0
    %142 = vmatpush2.msra.mxu0 0.0
    %143 = vmatprep.subr.mxu0 0.0
    %144 = vmatpush2.msra.mxu0 0.0
    %145 = vmatprep.subr.mxu0 0.0
    %146 = vmatpush2.msra.mxu0 0.0
    %147 = vmatprep.subr.mxu0 0.0
    %148 = vmatpush2.msra.mxu0 0.0
    %149 = vmatprep.subr.mxu0 0.0
    %150 = vmatpush2.msra.mxu0 0.0
    %151 = vmatprep.subr.mxu0 0.0
    %152 = vmatpush2.msra.mxu0 0.0
    %153 = vmatprep.subr.mxu0 0.0
    %154 = vmatpush2.msra.mxu0 0.0
    %155 = vmatprep.subr.mxu0 0.0
    %156 = vmatpush2.msra.mxu0 0.0
    %157 = vmatprep.subr.mxu0 0.0
    %158 = vmatpush2.msra.mxu0 0.0
    %159 = vmatprep.subr.mxu0 0.0
    %160 = vmatpush2.msra.mxu0 0.0
    %161 = vmatprep.subr.mxu0 0.0
    %162 = vmatpush2.msra.mxu0 0.0
    %163 = vmatprep.subr.mxu0 0.0
    %164 = vmatpush2.msra.mxu0 0.0
    %165 = vmatprep.subr.mxu0 0.0
    %166 = vmatpush2.msra.mxu0 0.0
    %167 = vmatprep.subr.mxu0 0.0
    %168 = vmatpush2.msra.mxu0 0.0
    %169 = vmatprep.mubr.f32.mxu0 0.0
    %170 = vmatmul.mubr.f32.gmra.mxu0 %v60
    %v171 = vpop.f32.mrf.mxu0
    %v172 = vadd.f32 %v98, %v171
    %v173 = vpop.f32.mrf.mxu0
    %v174 = vadd.f32 %v102, %v173
    %175 = vdwg.mxu0
    %v176 = vmax.f32 %v172, 0.0
    %v177 = vmax.f32 %v174, 0.0
    %v178 = vld [vmem:[#allocation7] sm:$0xff]
    %v179 = vld [vmem:[#allocation7 + $0x8] sm:$0xff]
    %v180 = vld [vmem:[#allocation7 + $0x10] sm:$0xff]
    %v181 = vld [vmem:[#allocation7 + $0x18] sm:$0xff]
    %v182 = vld [vmem:[#allocation7 + $0x20] sm:$0xff]
    %v183 = vld [vmem:[#allocation7 + $0x28] sm:$0xff]
    %v184 = vld [vmem:[#allocation7 + $0x30] sm:$0xff]
    %v185 = vld [vmem:[#allocation7 + $0x38] sm:$0xff]
    %v186 = vld [vmem:[#allocation7 + $0x40] sm:$0xff]
    %v187 = vld [vmem:[#allocation7 + $0x48] sm:$0xff]
    %v188 = vld [vmem:[#allocation7 + $0x50] sm:$0xff]
    %v189 = vld [vmem:[#allocation7 + $0x58] sm:$0xff]
    %v190 = vld [vmem:[#allocation7 + $0x60] sm:$0xff]
    %v191 = vld [vmem:[#allocation7 + $0x68] sm:$0xff]
    %v192 = vld [vmem:[#allocation7 + $0x70] sm:$0xff]
    %v193 = vld [vmem:[#allocation7 + $0x78] sm:$0xff]
    %v194 = vld [vmem:[#allocation7 + $0x80] sm:$0xff]
    %v195 = vld [vmem:[#allocation7 + $0x88] sm:$0xff]
    %v196 = vld [vmem:[#allocation7 + $0x90] sm:$0xff]
    %v197 = vld [vmem:[#allocation7 + $0x98] sm:$0xff]
    %v198 = vld [vmem:[#allocation7 + $0xa0] sm:$0xff]
    %v199 = vld [vmem:[#allocation7 + $0xa8] sm:$0xff]
    %v200 = vld [vmem:[#allocation7 + $0xb0] sm:$0xff]
    %v201 = vld [vmem:[#allocation7 + $0xb8] sm:$0xff]
    %v202 = vld [vmem:[#allocation7 + $0xc0] sm:$0xff]
    %v203 = vld [vmem:[#allocation7 + $0xc8] sm:$0xff]
    %v204 = vld [vmem:[#allocation7 + $0xd0] sm:$0xff]
    %v205 = vld [vmem:[#allocation7 + $0xd8] sm:$0xff]
    %v206 = vld [vmem:[#allocation7 + $0xe0] sm:$0xff]
    %v207 = vld [vmem:[#allocation7 + $0xe8] sm:$0xff]
    %v208 = vld [vmem:[#allocation7 + $0xf0] sm:$0xff]
    %v209 = vld [vmem:[#allocation7 + $0xf8] sm:$0xff]
    %v210 = vld [vmem:[%s4] sm:$0x1]
    %v212 = vlaneseq
    %v213 = vshrl.u32 %v212, 7
    %v214 = vsub.s32 0, %v213
    %v215 = vrot.slane %v210, %v214
    %217 = vmatprep.subr.mxu0 0.0
    %218 = vmatpush1.msra.mxu0 %v193
    %219 = vmatprep.subr.mxu0 0.0
    %220 = vmatpush1.msra.mxu0 %v192
    %221 = vmatprep.subr.mxu0 0.0
    %222 = vmatpush1.msra.mxu0 %v191
    %223 = vmatprep.subr.mxu0 0.0
    %224 = vmatpush1.msra.mxu0 %v190
    %225 = vmatprep.subr.mxu0 0.0
    %226 = vmatpush1.msra.mxu0 %v189
    %227 = vmatprep.subr.mxu0 0.0
    %228 = vmatpush1.msra.mxu0 %v188
    %229 = vmatprep.subr.mxu0 0.0
    %230 = vmatpush1.msra.mxu0 %v187
    %231 = vmatprep.subr.mxu0 0.0
    %232 = vmatpush1.msra.mxu0 %v186
    %233 = vmatprep.subr.mxu0 0.0
    %234 = vmatpush1.msra.mxu0 %v185
    %235 = vmatprep.subr.mxu0 0.0
    %236 = vmatpush1.msra.mxu0 %v184
    %237 = vmatprep.subr.mxu0 0.0
    %238 = vmatpush1.msra.mxu0 %v183
    %239 = vmatprep.subr.mxu0 0.0
    %240 = vmatpush1.msra.mxu0 %v182
    %241 = vmatprep.subr.mxu0 0.0
    %242 = vmatpush1.msra.mxu0 %v181
    %243 = vmatprep.subr.mxu0 0.0
    %244 = vmatpush1.msra.mxu0 %v180
    %245 = vmatprep.subr.mxu0 0.0
    %246 = vmatpush1.msra.mxu0 %v179
    %247 = vmatprep.subr.mxu0 0.0
    %248 = vmatpush1.msra.mxu0 %v178
    %249 = vmatprep.subr.mxu0 0.0
    %250 = vmatpush2.msra.mxu0 %v209
    %251 = vmatprep.subr.mxu0 0.0
    %252 = vmatpush2.msra.mxu0 %v208
    %253 = vmatprep.subr.mxu0 0.0
    %254 = vmatpush2.msra.mxu0 %v207
    %255 = vmatprep.subr.mxu0 0.0
    %256 = vmatpush2.msra.mxu0 %v206
    %257 = vmatprep.subr.mxu0 0.0
    %258 = vmatpush2.msra.mxu0 %v205
    %259 = vmatprep.subr.mxu0 0.0
    %260 = vmatpush2.msra.mxu0 %v204
    %261 = vmatprep.subr.mxu0 0.0
    %262 = vmatpush2.msra.mxu0 %v203
    %263 = vmatprep.subr.mxu0 0.0
    %264 = vmatpush2.msra.mxu0 %v202
    %265 = vmatprep.subr.mxu0 0.0
    %266 = vmatpush2.msra.mxu0 %v201
    %267 = vmatprep.subr.mxu0 0.0
    %268 = vmatpush2.msra.mxu0 %v200
    %269 = vmatprep.subr.mxu0 0.0
    %270 = vmatpush2.msra.mxu0 %v199
    %271 = vmatprep.subr.mxu0 0.0
    %272 = vmatpush2.msra.mxu0 %v198
    %273 = vmatprep.subr.mxu0 0.0
    %274 = vmatpush2.msra.mxu0 %v197
    %275 = vmatprep.subr.mxu0 0.0
    %276 = vmatpush2.msra.mxu0 %v196
    %277 = vmatprep.subr.mxu0 0.0
    %278 = vmatpush2.msra.mxu0 %v195
    %279 = vmatprep.subr.mxu0 0.0
    %280 = vmatpush2.msra.mxu0 %v194
    %281 = vmatprep.mubr.f32.mxu0 %v177
    %282 = vmatmul.mubr.f32.gmra.mxu0 %v176
    %v283 = vpop.f32.mrf.mxu0
    %v284 = vadd.f32 %v215, %v283
    %v285 = vpop.f32.mrf.mxu0
    %286 = vdwg.mxu0
    %287 = vst [vmem:[#allocation8] sm:$0xff] %v284
    // Predicated region
    $region34: #{tpu_custom_call.1} parent=1 // pred_check
      _
    $region35: #{tpu_custom_call.1} parent=1 // pred_check_branch
      %289 = sbr.rel (0) target = $region37
    $region36: #{tpu_custom_call.1} parent=1 // pred_region
      %s291 = ssub.s32 128, 128
      %292 = vsyncadd [#allocation4], %s291
      %s294 = sshll.u32 [#allocation8], 4
      %s295 = int_to_ptr.vmem [resolvable:$true] %s294
      %297 = dma.vmem_to_hbm [thread:$0]  %s295, 128, %s5, [#allocation4]
    $region37: #{tpu_custom_call.1} parent=1 // pred_fallthru
      _
    // Predicated region
    $region38: #{tpu_custom_call.1} parent=1 // pred_check
      _
    $region39: #{tpu_custom_call.1} parent=1 // pred_check_branch
      %299 = sbr.rel (0) target = $region41
    $region40: #{tpu_custom_call.1} parent=1 // pred_region
      %300 = dma.done [#allocation4], 128
    $region41: #{tpu_custom_call.1} parent=1 // pred_fallthru
      _
    %301 = vsyncpa [#allocation3], 1
    %302 = vsyncpa [#allocation6], 1
    %303 = vsyncpa [#allocation4], 1

</llo_original>
